<compile_context>
chip_gen: v6e
topology: v6e:2x2x1
jax: 0.10.0
libtpu: 0.0.40
codegen_flags: <defaults>
</compile_context>

<pallas_src>
import jax
import jax.numpy as jnp
import numpy as np
from jax import lax
from jax.experimental import pallas as pl
from jax.experimental.pallas import tpu as pltpu


def _pick_batch_fold(N, W, max_lanes=256):
    """Largest divisor NB of N with NB * W <= max_lanes (at least 1)."""
    nb = 1
    for cand in range(1, N + 1):
        if N % cand == 0 and cand * W <= max_lanes:
            nb = cand
    return nb


def _make_fused_kernel(Cin, H, L, Cout2):
    """Fused ConvT(3x3,s2,p1) -> ConvT(2x2,s2) -> sigmoid, polyphase form.

    Kernel refs:
      w1_ref : SMEM (Cin*9,)    layer-1 weight, PyTorch (Cin,1,3,3) flattened
      b1_ref : SMEM (1,)        layer-1 bias
      w2_ref : SMEM (Cout2*4,)  layer-2 weight, PyTorch (1,Cout2,2,2) flattened
      b2_ref : SMEM (Cout2,)    layer-2 bias
      x_ref  : VMEM (1, Cin, H+1, L+1)  batch-folded, zero-padded input block
      o_ref  : VMEM (1, Cout2, 4, H, 4L) output slab:
               o[co, kh*2+kw, a, (r*2+s)*L + j] = sigmoid-out at
               row = 4a + 2r + kh, col(within fold) = 4*(j%W) + 2s + kw
      q_ref  : VMEM (H, 4L) scratch holding the 4 stage-1 phases side by side
    """

    def kernel(w1_ref, b1_ref, w2_ref, b2_ref, x_ref, o_ref, q_ref):
        b1 = b1_ref[0]

        def w1(ci, kh, kw):          # (Cin, 1, 3, 3) flattened
            return w1_ref[(ci * 3 + kh) * 3 + kw]

        def w2(co, kh, kw):          # (1, Cout2, 2, 2) flattened
            return w2_ref[(co * 2 + kh) * 2 + kw]

        # ---------- stage 1: polyphase ConvTranspose2d(3x3, stride 2, pad 1) -------
        # v1[2a + r, 2c + s] = p_rs[a, c] + b1, with
        #   p00 = w[1,1]*x[a,c]
        #   p01 = w[1,0]*x[a,c+1] + w[1,2]*x[a,c]
        #   p10 = w[0,1]*x[a+1,c] + w[2,1]*x[a,c]
        #   p11 = w[0,0]*x[a+1,c+1] + w[0,2]*x[a+1,c] + w[2,0]*x[a,c+1] + w[2,2]*x[a,c]
        # Shifted views are full (H, L) slices of the padded block; positions that
        # read padding / the neighbouring folded image only feed cropped outputs.
        p00 = p01 = p10 = p11 = None
        for ci in range(Cin):
            xf = x_ref[0, ci, 0:H, 0:L]            # x[a,   c  ]
            xc = x_ref[0, ci, 0:H, 1:L + 1]        # x[a,   c+1]
            xr = x_ref[0, ci, 1:H + 1, 0:L]        # x[a+1, c  ]
            xrc = x_ref[0, ci, 1:H + 1, 1:L + 1]   # x[a+1, c+1]

            c00 = w1(ci, 1, 1) * xf
            c01 = w1(ci, 1, 0) * xc + w1(ci, 1, 2) * xf
            c10 = w1(ci, 0, 1) * xr + w1(ci, 2, 1) * xf
            c11 = (w1(ci, 0, 0) * xrc + w1(ci, 0, 2) * xr) + \
                  (w1(ci, 2, 0) * xc + w1(ci, 2, 2) * xf)

            if p00 is None:                         # per-channel accumulation:
                p00, p01, p10, p11 = c00, c01, c10, c11   # keeps live set small
            else:
                p00 = p00 + c00
                p01 = p01 + c01
                p10 = p10 + c10
                p11 = p11 + c11

        # Pack the 4 phases side by side along lanes: q[:, (r*2+s)*L : ...] = p_rs
        q_ref[:, 0 * L:1 * L] = p00 + b1
        q_ref[:, 1 * L:2 * L] = p01 + b1
        q_ref[:, 2 * L:3 * L] = p10 + b1
        q_ref[:, 3 * L:4 * L] = p11 + b1
        q = q_ref[...]                              # (H, 4L), reused 12x below

        # ---------- stage 2: ConvTranspose2d(2x2, stride 2) + sigmoid --------------
        # out[co, 2i+kh, 2j+kw] = sigmoid(v1[i, j] * w2[0,co,kh,kw] + b2[co]):
        # one wide scalar-mul + add + sigmoid + full-width store per (co, kh, kw).
        for co in range(Cout2):
            b2c = b2_ref[co]
            for kh in range(2):
                for kw in range(2):
                    o_ref[0, co, kh * 2 + kw, :, :] = jax.nn.sigmoid(
                        w2(co, kh, kw) * q + b2c)

    return kernel


def fused_deconv_sigmoid_pallas(x, w1, b1, w2, b2):
    """sigmoid(ConvT2(ConvT1(x))) with PyTorch ConvTranspose2d semantics.

    x  : (N, 3, H, W) f32
    w1 : (3, 1, 3, 3) f32   (ConvTranspose2d(3,1,3,stride=2,padding=1) weight)
    b1 : (1,)         f32
    w2 : (1, 3, 2, 2) f32   (ConvTranspose2d(1,3,2,stride=2) weight)
    b2 : (3,)         f32
    returns (N, 3, 4H-2, 4W-2) f32
    """
    N, Cin, H, W = x.shape
    assert w1.shape == (Cin, 1, 3, 3), w1.shape
    Cout2 = w2.shape[1]
    assert w2.shape == (1, Cout2, 2, 2), w2.shape
    # NOTE: output_padding=0 (PyTorch default) is assumed.
    Hout, Wout = 4 * H - 2, 4 * W - 2

    NB = _pick_batch_fold(N, W)      # images folded into the lane axis per block
    G = N // NB                      # grid steps
    L = NB * W                       # folded lane width

    x = x.astype(jnp.float32)
    # Fold NB images into the lane axis, then zero-pad one row and one column so
    # every shifted view in the kernel is a full (H, L) slice.  The padded /
    # cross-image positions only contribute to output rows/cols >= Hout/Wout,
    # which are cropped at the end.
    xf = x.reshape(G, NB, Cin, H, W).transpose(0, 2, 3, 1, 4).reshape(G, Cin, H, L)
    xf = jnp.pad(xf, ((0, 0), (0, 0), (0, 1), (0, 1)))

    kernel = _make_fused_kernel(Cin, H, L, Cout2)

    slab = pl.pallas_call(
        kernel,
        out_shape=jax.ShapeDtypeStruct((G, Cout2, 4, H, 4 * L), jnp.float32),
        grid=(G,),
        in_specs=[
            pl.BlockSpec(memory_space=pltpu.SMEM),                      # w1 flat
            pl.BlockSpec(memory_space=pltpu.SMEM),                      # b1
            pl.BlockSpec(memory_space=pltpu.SMEM),                      # w2 flat
            pl.BlockSpec(memory_space=pltpu.SMEM),                      # b2
            pl.BlockSpec((1, Cin, H + 1, L + 1), lambda g: (g, 0, 0, 0)),
        ],
        out_specs=pl.BlockSpec((1, Cout2, 4, H, 4 * L),
                               lambda g: (g, 0, 0, 0, 0)),
        scratch_shapes=[pltpu.VMEM((H, 4 * L), jnp.float32)],
        compiler_params=pltpu.CompilerParams(dimension_semantics=("parallel",)),
    )(
        w1.reshape(-1).astype(jnp.float32),
        b1.astype(jnp.float32),
        w2.reshape(-1).astype(jnp.float32),
        b2.astype(jnp.float32),
        xf,
    )

    # Pure layout plumbing (jitted XLA): slab -> NCHW output.
    # slab[g, co, kh*2+kw, a, (r*2+s)*L + nb*W + c]
    #   -> out[g*NB + nb, co, 4a + 2r + kh, 4c + 2s + kw]
    out = slab.reshape(G, Cout2, 2, 2, H, 2, 2, NB, W)
    out = out.transpose(0, 7, 1, 4, 5, 2, 8, 6, 3).reshape(N, Cout2, 4 * H, 4 * W)
    return out[:, :, :Hout, :Wout]


def conv_transpose2d_ref(x, w_pt, b, *, stride, padding):
    """Pure-JAX (XLA) ConvTranspose2d reference for verification."""
    Cin, Cout, KH, KW = w_pt.shape
    w_conv = jnp.transpose(w_pt[:, :, ::-1, ::-1], (1, 0, 2, 3))
    y = lax.conv_general_dilated(
        x, w_conv,
        window_strides=(1, 1),
        padding=[(KH - 1 - padding,) * 2, (KW - 1 - padding,) * 2],
        lhs_dilation=(stride, stride),
        dimension_numbers=("NCHW", "OIHW", "NCHW"),
    )
    return y + b[None, :, None, None]


if __name__ == "__main__":
    key = jax.random.PRNGKey(0)
    k_x, k_w1, k_b1, k_w2, k_b2 = jax.random.split(key, 5)

    # deconv1: ConvTranspose2d(3, 1, 3, stride=2, padding=1) -> weight (3, 1, 3, 3)
    w1 = jax.random.normal(k_w1, (3, 1, 3, 3), dtype=jnp.float32) * 0.1
    b1 = jax.random.normal(k_b1, (1,), dtype=jnp.float32) * 0.1
    # deconv2: ConvTranspose2d(1, 3, 2, stride=2) -> weight (1, 3, 2, 2)
    w2 = jax.random.normal(k_w2, (1, 3, 2, 2), dtype=jnp.float32) * 0.1
    b2 = jax.random.normal(k_b2, (3,), dtype=jnp.float32) * 0.1

    fwd = jax.jit(fused_deconv_sigmoid_pallas)

    # Primary small test (N=2, lane-dense path) plus a non-square shape to
    # validate the phase/crop mapping for general H, W, N.
    for shape in [(2, 3, 16, 16), (1, 3, 12, 20)]:
        x = jax.random.normal(k_x, shape, dtype=jnp.float32)
        out = jax.block_until_ready(fwd(x, w1, b1, w2, b2))

        v1_ref = conv_transpose2d_ref(x, w1, b1, stride=2, padding=1)
        v2_ref = conv_transpose2d_ref(v1_ref, w2, b2, stride=2, padding=0)
        ref = jax.nn.sigmoid(v2_ref)

        N, _, H, W = shape
        assert out.shape == (N, 3, 4 * H - 2, 4 * W - 2), out.shape
        np.testing.assert_allclose(np.asarray(out), np.asarray(ref),
                                   rtol=1e-5, atol=1e-5)

    print("KERNEL_OK")
</pallas_src>

<mosaic_0001>
module attributes {stable_mosaic.version = 11 : i64} {
  func.func @kernel(%arg0: i32, %arg1: memref<27xf32, #tpu.memory_space<smem>>, %arg2: memref<1xf32, #tpu.memory_space<smem>>, %arg3: memref<12xf32, #tpu.memory_space<smem>>, %arg4: memref<3xf32, #tpu.memory_space<smem>>, %arg5: memref<1x3x17x33xf32, #tpu.memory_space<vmem>>, %arg6: memref<1x3x4x16x128xf32, #tpu.memory_space<vmem>>, %arg7: memref<16x128xf32, #tpu.memory_space<vmem>>) attributes {dimension_semantics = [#tpu.dimension_semantics<parallel>], iteration_bounds = array<i64: 1>, scalar_prefetch = 0 : i64, scratch_operands = 1 : i64, tpu.core_type = #tpu.core_type<tc>, window_params = [{transform_indices = @transform_0, window_bounds = array<i64: 27>}, {transform_indices = @transform_1, window_bounds = array<i64: 1>}, {transform_indices = @transform_2, window_bounds = array<i64: 12>}, {transform_indices = @transform_3, window_bounds = array<i64: 3>}, {transform_indices = @transform_4, window_bounds = array<i64: 1, 3, 17, 33>}, {transform_indices = @transform_5, window_bounds = array<i64: 1, 3, 4, 16, 128>}]} {
    %c0 = arith.constant 0 : index
    %0 = memref.load %arg2[%c0] : memref<1xf32, #tpu.memory_space<smem>>
    %c0_0 = arith.constant 0 : index
    %c0_1 = arith.constant 0 : index
    %c0_2 = arith.constant 0 : index
    %c0_3 = arith.constant 0 : index
    %1 = vector.load %arg5[%c0_0, %c0_1, %c0_2, %c0_3] : memref<1x3x17x33xf32, #tpu.memory_space<vmem>>, vector<1x1x16x32xf32>
    %2 = vector.shape_cast %1 : vector<1x1x16x32xf32> to vector<16x32xf32>
    %c0_4 = arith.constant 0 : index
    %c0_5 = arith.constant 0 : index
    %c0_6 = arith.constant 0 : index
    %c1 = arith.constant 1 : index
    %3 = vector.load %arg5[%c0_4, %c0_5, %c0_6, %c1] : memref<1x3x17x33xf32, #tpu.memory_space<vmem>>, vector<1x1x16x32xf32>
    %4 = vector.shape_cast %3 : vector<1x1x16x32xf32> to vector<16x32xf32>
    %c0_7 = arith.constant 0 : index
    %c0_8 = arith.constant 0 : index
    %c1_9 = arith.constant 1 : index
    %c0_10 = arith.constant 0 : index
    %5 = vector.load %arg5[%c0_7, %c0_8, %c1_9, %c0_10] : memref<1x3x17x33xf32, #tpu.memory_space<vmem>>, vector<1x1x16x32xf32>
    %6 = vector.shape_cast %5 : vector<1x1x16x32xf32> to vector<16x32xf32>
    %c0_11 = arith.constant 0 : index
    %c0_12 = arith.constant 0 : index
    %c1_13 = arith.constant 1 : index
    %c1_14 = arith.constant 1 : index
    %7 = vector.load %arg5[%c0_11, %c0_12, %c1_13, %c1_14] : memref<1x3x17x33xf32, #tpu.memory_space<vmem>>, vector<1x1x16x32xf32>
    %8 = vector.shape_cast %7 : vector<1x1x16x32xf32> to vector<16x32xf32>
    %c4 = arith.constant 4 : index
    %9 = memref.load %arg1[%c4] : memref<27xf32, #tpu.memory_space<smem>>
    %10 = vector.broadcast %9 : f32 to vector<16x32xf32>
    %11 = arith.mulf %10, %2 : vector<16x32xf32>
    %c3 = arith.constant 3 : index
    %12 = memref.load %arg1[%c3] : memref<27xf32, #tpu.memory_space<smem>>
    %13 = vector.broadcast %12 : f32 to vector<16x32xf32>
    %14 = arith.mulf %13, %4 : vector<16x32xf32>
    %c5 = arith.constant 5 : index
    %15 = memref.load %arg1[%c5] : memref<27xf32, #tpu.memory_space<smem>>
    %16 = vector.broadcast %15 : f32 to vector<16x32xf32>
    %17 = arith.mulf %16, %2 : vector<16x32xf32>
    %18 = arith.addf %14, %17 : vector<16x32xf32>
    %c1_15 = arith.constant 1 : index
    %19 = memref.load %arg1[%c1_15] : memref<27xf32, #tpu.memory_space<smem>>
    %20 = vector.broadcast %19 : f32 to vector<16x32xf32>
    %21 = arith.mulf %20, %6 : vector<16x32xf32>
    %c7 = arith.constant 7 : index
    %22 = memref.load %arg1[%c7] : memref<27xf32, #tpu.memory_space<smem>>
    %23 = vector.broadcast %22 : f32 to vector<16x32xf32>
    %24 = arith.mulf %23, %2 : vector<16x32xf32>
    %25 = arith.addf %21, %24 : vector<16x32xf32>
    %c0_16 = arith.constant 0 : index
    %26 = memref.load %arg1[%c0_16] : memref<27xf32, #tpu.memory_space<smem>>
    %27 = vector.broadcast %26 : f32 to vector<16x32xf32>
    %28 = arith.mulf %27, %8 : vector<16x32xf32>
    %c2 = arith.constant 2 : index
    %29 = memref.load %arg1[%c2] : memref<27xf32, #tpu.memory_space<smem>>
    %30 = vector.broadcast %29 : f32 to vector<16x32xf32>
    %31 = arith.mulf %30, %6 : vector<16x32xf32>
    %32 = arith.addf %28, %31 : vector<16x32xf32>
    %c6 = arith.constant 6 : index
    %33 = memref.load %arg1[%c6] : memref<27xf32, #tpu.memory_space<smem>>
    %34 = vector.broadcast %33 : f32 to vector<16x32xf32>
    %35 = arith.mulf %34, %4 : vector<16x32xf32>
    %c8 = arith.constant 8 : index
    %36 = memref.load %arg1[%c8] : memref<27xf32, #tpu.memory_space<smem>>
    %37 = vector.broadcast %36 : f32 to vector<16x32xf32>
    %38 = arith.mulf %37, %2 : vector<16x32xf32>
    %39 = arith.addf %35, %38 : vector<16x32xf32>
    %40 = arith.addf %32, %39 : vector<16x32xf32>
    %c0_17 = arith.constant 0 : index
    %c1_18 = arith.constant 1 : index
    %c0_19 = arith.constant 0 : index
    %c0_20 = arith.constant 0 : index
    %41 = vector.load %arg5[%c0_17, %c1_18, %c0_19, %c0_20] : memref<1x3x17x33xf32, #tpu.memory_space<vmem>>, vector<1x1x16x32xf32>
    %42 = vector.shape_cast %41 : vector<1x1x16x32xf32> to vector<16x32xf32>
    %c0_21 = arith.constant 0 : index
    %c1_22 = arith.constant 1 : index
    %c0_23 = arith.constant 0 : index
    %c1_24 = arith.constant 1 : index
    %43 = vector.load %arg5[%c0_21, %c1_22, %c0_23, %c1_24] : memref<1x3x17x33xf32, #tpu.memory_space<vmem>>, vector<1x1x16x32xf32>
    %44 = vector.shape_cast %43 : vector<1x1x16x32xf32> to vector<16x32xf32>
    %c0_25 = arith.constant 0 : index
    %c1_26 = arith.constant 1 : index
    %c1_27 = arith.constant 1 : index
    %c0_28 = arith.constant 0 : index
    %45 = vector.load %arg5[%c0_25, %c1_26, %c1_27, %c0_28] : memref<1x3x17x33xf32, #tpu.memory_space<vmem>>, vector<1x1x16x32xf32>
    %46 = vector.shape_cast %45 : vector<1x1x16x32xf32> to vector<16x32xf32>
    %c0_29 = arith.constant 0 : index
    %c1_30 = arith.constant 1 : index
    %c1_31 = arith.constant 1 : index
    %c1_32 = arith.constant 1 : index
    %47 = vector.load %arg5[%c0_29, %c1_30, %c1_31, %c1_32] : memref<1x3x17x33xf32, #tpu.memory_space<vmem>>, vector<1x1x16x32xf32>
    %48 = vector.shape_cast %47 : vector<1x1x16x32xf32> to vector<16x32xf32>
    %c13 = arith.constant 13 : index
    %49 = memref.load %arg1[%c13] : memref<27xf32, #tpu.memory_space<smem>>
    %50 = vector.broadcast %49 : f32 to vector<16x32xf32>
    %51 = arith.mulf %50, %42 : vector<16x32xf32>
    %c12 = arith.constant 12 : index
    %52 = memref.load %arg1[%c12] : memref<27xf32, #tpu.memory_space<smem>>
    %53 = vector.broadcast %52 : f32 to vector<16x32xf32>
    %54 = arith.mulf %53, %44 : vector<16x32xf32>
    %c14 = arith.constant 14 : index
    %55 = memref.load %arg1[%c14] : memref<27xf32, #tpu.memory_space<smem>>
    %56 = vector.broadcast %55 : f32 to vector<16x32xf32>
    %57 = arith.mulf %56, %42 : vector<16x32xf32>
    %58 = arith.addf %54, %57 : vector<16x32xf32>
    %c10 = arith.constant 10 : index
    %59 = memref.load %arg1[%c10] : memref<27xf32, #tpu.memory_space<smem>>
    %60 = vector.broadcast %59 : f32 to vector<16x32xf32>
    %61 = arith.mulf %60, %46 : vector<16x32xf32>
    %c16 = arith.constant 16 : index
    %62 = memref.load %arg1[%c16] : memref<27xf32, #tpu.memory_space<smem>>
    %63 = vector.broadcast %62 : f32 to vector<16x32xf32>
    %64 = arith.mulf %63, %42 : vector<16x32xf32>
    %65 = arith.addf %61, %64 : vector<16x32xf32>
    %c9 = arith.constant 9 : index
    %66 = memref.load %arg1[%c9] : memref<27xf32, #tpu.memory_space<smem>>
    %67 = vector.broadcast %66 : f32 to vector<16x32xf32>
    %68 = arith.mulf %67, %48 : vector<16x32xf32>
    %c11 = arith.constant 11 : index
    %69 = memref.load %arg1[%c11] : memref<27xf32, #tpu.memory_space<smem>>
    %70 = vector.broadcast %69 : f32 to vector<16x32xf32>
    %71 = arith.mulf %70, %46 : vector<16x32xf32>
    %72 = arith.addf %68, %71 : vector<16x32xf32>
    %c15 = arith.constant 15 : index
    %73 = memref.load %arg1[%c15] : memref<27xf32, #tpu.memory_space<smem>>
    %74 = vector.broadcast %73 : f32 to vector<16x32xf32>
    %75 = arith.mulf %74, %44 : vector<16x32xf32>
    %c17 = arith.constant 17 : index
    %76 = memref.load %arg1[%c17] : memref<27xf32, #tpu.memory_space<smem>>
    %77 = vector.broadcast %76 : f32 to vector<16x32xf32>
    %78 = arith.mulf %77, %42 : vector<16x32xf32>
    %79 = arith.addf %75, %78 : vector<16x32xf32>
    %80 = arith.addf %72, %79 : vector<16x32xf32>
    %81 = arith.addf %11, %51 : vector<16x32xf32>
    %82 = arith.addf %18, %58 : vector<16x32xf32>
    %83 = arith.addf %25, %65 : vector<16x32xf32>
    %84 = arith.addf %40, %80 : vector<16x32xf32>
    %c0_33 = arith.constant 0 : index
    %c2_34 = arith.constant 2 : index
    %c0_35 = arith.constant 0 : index
    %c0_36 = arith.constant 0 : index
    %85 = vector.load %arg5[%c0_33, %c2_34, %c0_35, %c0_36] : memref<1x3x17x33xf32, #tpu.memory_space<vmem>>, vector<1x1x16x32xf32>
    %86 = vector.shape_cast %85 : vector<1x1x16x32xf32> to vector<16x32xf32>
    %c0_37 = arith.constant 0 : index
    %c2_38 = arith.constant 2 : index
    %c0_39 = arith.constant 0 : index
    %c1_40 = arith.constant 1 : index
    %87 = vector.load %arg5[%c0_37, %c2_38, %c0_39, %c1_40] : memref<1x3x17x33xf32, #tpu.memory_space<vmem>>, vector<1x1x16x32xf32>
    %88 = vector.shape_cast %87 : vector<1x1x16x32xf32> to vector<16x32xf32>
    %c0_41 = arith.constant 0 : index
    %c2_42 = arith.constant 2 : index
    %c1_43 = arith.constant 1 : index
    %c0_44 = arith.constant 0 : index
    %89 = vector.load %arg5[%c0_41, %c2_42, %c1_43, %c0_44] : memref<1x3x17x33xf32, #tpu.memory_space<vmem>>, vector<1x1x16x32xf32>
    %90 = vector.shape_cast %89 : vector<1x1x16x32xf32> to vector<16x32xf32>
    %c0_45 = arith.constant 0 : index
    %c2_46 = arith.constant 2 : index
    %c1_47 = arith.constant 1 : index
    %c1_48 = arith.constant 1 : index
    %91 = vector.load %arg5[%c0_45, %c2_46, %c1_47, %c1_48] : memref<1x3x17x33xf32, #tpu.memory_space<vmem>>, vector<1x1x16x32xf32>
    %92 = vector.shape_cast %91 : vector<1x1x16x32xf32> to vector<16x32xf32>
    %c22 = arith.constant 22 : index
    %93 = memref.load %arg1[%c22] : memref<27xf32, #tpu.memory_space<smem>>
    %94 = vector.broadcast %93 : f32 to vector<16x32xf32>
    %95 = arith.mulf %94, %86 : vector<16x32xf32>
    %c21 = arith.constant 21 : index
    %96 = memref.load %arg1[%c21] : memref<27xf32, #tpu.memory_space<smem>>
    %97 = vector.broadcast %96 : f32 to vector<16x32xf32>
    %98 = arith.mulf %97, %88 : vector<16x32xf32>
    %c23 = arith.constant 23 : index
    %99 = memref.load %arg1[%c23] : memref<27xf32, #tpu.memory_space<smem>>
    %100 = vector.broadcast %99 : f32 to vector<16x32xf32>
    %101 = arith.mulf %100, %86 : vector<16x32xf32>
    %102 = arith.addf %98, %101 : vector<16x32xf32>
    %c19 = arith.constant 19 : index
    %103 = memref.load %arg1[%c19] : memref<27xf32, #tpu.memory_space<smem>>
    %104 = vector.broadcast %103 : f32 to vector<16x32xf32>
    %105 = arith.mulf %104, %90 : vector<16x32xf32>
    %c25 = arith.constant 25 : index
    %106 = memref.load %arg1[%c25] : memref<27xf32, #tpu.memory_space<smem>>
    %107 = vector.broadcast %106 : f32 to vector<16x32xf32>
    %108 = arith.mulf %107, %86 : vector<16x32xf32>
    %109 = arith.addf %105, %108 : vector<16x32xf32>
    %c18 = arith.constant 18 : index
    %110 = memref.load %arg1[%c18] : memref<27xf32, #tpu.memory_space<smem>>
    %111 = vector.broadcast %110 : f32 to vector<16x32xf32>
    %112 = arith.mulf %111, %92 : vector<16x32xf32>
    %c20 = arith.constant 20 : index
    %113 = memref.load %arg1[%c20] : memref<27xf32, #tpu.memory_space<smem>>
    %114 = vector.broadcast %113 : f32 to vector<16x32xf32>
    %115 = arith.mulf %114, %90 : vector<16x32xf32>
    %116 = arith.addf %112, %115 : vector<16x32xf32>
    %c24 = arith.constant 24 : index
    %117 = memref.load %arg1[%c24] : memref<27xf32, #tpu.memory_space<smem>>
    %118 = vector.broadcast %117 : f32 to vector<16x32xf32>
    %119 = arith.mulf %118, %88 : vector<16x32xf32>
    %c26 = arith.constant 26 : index
    %120 = memref.load %arg1[%c26] : memref<27xf32, #tpu.memory_space<smem>>
    %121 = vector.broadcast %120 : f32 to vector<16x32xf32>
    %122 = arith.mulf %121, %86 : vector<16x32xf32>
    %123 = arith.addf %119, %122 : vector<16x32xf32>
    %124 = arith.addf %116, %123 : vector<16x32xf32>
    %125 = arith.addf %81, %95 : vector<16x32xf32>
    %126 = arith.addf %82, %102 : vector<16x32xf32>
    %127 = arith.addf %83, %109 : vector<16x32xf32>
    %128 = arith.addf %84, %124 : vector<16x32xf32>
    %129 = vector.broadcast %0 : f32 to vector<16x32xf32>
    %130 = arith.addf %125, %129 : vector<16x32xf32>
    %c0_49 = arith.constant 0 : index
    %c0_50 = arith.constant 0 : index
    %131 = vector.load %arg7[%c0_49, %c0_50] : memref<16x128xf32, #tpu.memory_space<vmem>>, vector<16x32xf32>
    tpu.vector_store %arg7[%c0_49, %c0_50], %130 {strides = array<i32>} : memref<16x128xf32, #tpu.memory_space<vmem>>, vector<16x32xf32>,
    %132 = vector.broadcast %0 : f32 to vector<16x32xf32>
    %133 = arith.addf %126, %132 : vector<16x32xf32>
    %c0_51 = arith.constant 0 : index
    %c32 = arith.constant 32 : index
    %134 = vector.load %arg7[%c0_51, %c32] : memref<16x128xf32, #tpu.memory_space<vmem>>, vector<16x32xf32>
    tpu.vector_store %arg7[%c0_51, %c32], %133 {strides = array<i32>} : memref<16x128xf32, #tpu.memory_space<vmem>>, vector<16x32xf32>,
    %135 = vector.broadcast %0 : f32 to vector<16x32xf32>
    %136 = arith.addf %127, %135 : vector<16x32xf32>
    %c0_52 = arith.constant 0 : index
    %c64 = arith.constant 64 : index
    %137 = vector.load %arg7[%c0_52, %c64] : memref<16x128xf32, #tpu.memory_space<vmem>>, vector<16x32xf32>
    tpu.vector_store %arg7[%c0_52, %c64], %136 {strides = array<i32>} : memref<16x128xf32, #tpu.memory_space<vmem>>, vector<16x32xf32>,
    %138 = vector.broadcast %0 : f32 to vector<16x32xf32>
    %139 = arith.addf %128, %138 : vector<16x32xf32>
    %c0_53 = arith.constant 0 : index
    %c96 = arith.constant 96 : index
    %140 = vector.load %arg7[%c0_53, %c96] : memref<16x128xf32, #tpu.memory_space<vmem>>, vector<16x32xf32>
    tpu.vector_store %arg7[%c0_53, %c96], %139 {strides = array<i32>} : memref<16x128xf32, #tpu.memory_space<vmem>>, vector<16x32xf32>,
    %c0_54 = arith.constant 0 : index
    %c0_55 = arith.constant 0 : index
    %141 = vector.load %arg7[%c0_54, %c0_55] : memref<16x128xf32, #tpu.memory_space<vmem>>, vector<16x128xf32>
    %c0_56 = arith.constant 0 : index
    %142 = memref.load %arg4[%c0_56] : memref<3xf32, #tpu.memory_space<smem>>
    %c0_57 = arith.constant 0 : index
    %143 = memref.load %arg3[%c0_57] : memref<12xf32, #tpu.memory_space<smem>>
    %144 = vector.broadcast %143 : f32 to vector<16x128xf32>
    %145 = arith.mulf %144, %141 : vector<16x128xf32>
    %146 = vector.broadcast %142 : f32 to vector<16x128xf32>
    %147 = arith.addf %145, %146 : vector<16x128xf32>
    %148 = arith.negf %147 : vector<16x128xf32>
    %149 = math.exp %148 : vector<16x128xf32>
    %cst = arith.constant 1.000000e+00 : f32
    %150 = vector.broadcast %cst : f32 to vector<16x128xf32>
    %151 = arith.addf %150, %149 : vector<16x128xf32>
    %152 = arith.divf %150, %151 : vector<16x128xf32>
    %c0_58 = arith.constant 0 : index
    %c0_59 = arith.constant 0 : index
    %c0_60 = arith.constant 0 : index
    %c0_61 = arith.constant 0 : index
    %c0_62 = arith.constant 0 : index
    %153 = vector.load %arg6[%c0_58, %c0_59, %c0_60, %c0_61, %c0_62] : memref<1x3x4x16x128xf32, #tpu.memory_space<vmem>>, vector<1x1x1x16x128xf32>
    %154 = vector.shape_cast %153 : vector<1x1x1x16x128xf32> to vector<16x128xf32>
    %155 = vector.shape_cast %152 : vector<16x128xf32> to vector<1x1x1x16x128xf32>
    tpu.vector_store %arg6[%c0_58, %c0_59, %c0_60, %c0_61, %c0_62], %155 {strides = array<i32>} : memref<1x3x4x16x128xf32, #tpu.memory_space<vmem>>, vector<1x1x1x16x128xf32>,
    %c1_63 = arith.constant 1 : index
    %156 = memref.load %arg3[%c1_63] : memref<12xf32, #tpu.memory_space<smem>>
    %157 = vector.broadcast %156 : f32 to vector<16x128xf32>
    %158 = arith.mulf %157, %141 : vector<16x128xf32>
    %159 = vector.broadcast %142 : f32 to vector<16x128xf32>
    %160 = arith.addf %158, %159 : vector<16x128xf32>
    %161 = arith.negf %160 : vector<16x128xf32>
    %162 = math.exp %161 : vector<16x128xf32>
    %cst_64 = arith.constant 1.000000e+00 : f32
    %163 = vector.broadcast %cst_64 : f32 to vector<16x128xf32>
    %164 = arith.addf %163, %162 : vector<16x128xf32>
    %165 = arith.divf %163, %164 : vector<16x128xf32>
    %c0_65 = arith.constant 0 : index
    %c0_66 = arith.constant 0 : index
    %c1_67 = arith.constant 1 : index
    %c0_68 = arith.constant 0 : index
    %c0_69 = arith.constant 0 : index
    %166 = vector.load %arg6[%c0_65, %c0_66, %c1_67, %c0_68, %c0_69] : memref<1x3x4x16x128xf32, #tpu.memory_space<vmem>>, vector<1x1x1x16x128xf32>
    %167 = vector.shape_cast %166 : vector<1x1x1x16x128xf32> to vector<16x128xf32>
    %168 = vector.shape_cast %165 : vector<16x128xf32> to vector<1x1x1x16x128xf32>
    tpu.vector_store %arg6[%c0_65, %c0_66, %c1_67, %c0_68, %c0_69], %168 {strides = array<i32>} : memref<1x3x4x16x128xf32, #tpu.memory_space<vmem>>, vector<1x1x1x16x128xf32>,
    %c2_70 = arith.constant 2 : index
    %169 = memref.load %arg3[%c2_70] : memref<12xf32, #tpu.memory_space<smem>>
    %170 = vector.broadcast %169 : f32 to vector<16x128xf32>
    %171 = arith.mulf %170, %141 : vector<16x128xf32>
    %172 = vector.broadcast %142 : f32 to vector<16x128xf32>
    %173 = arith.addf %171, %172 : vector<16x128xf32>
    %174 = arith.negf %173 : vector<16x128xf32>
    %175 = math.exp %174 : vector<16x128xf32>
    %cst_71 = arith.constant 1.000000e+00 : f32
    %176 = vector.broadcast %cst_71 : f32 to vector<16x128xf32>
    %177 = arith.addf %176, %175 : vector<16x128xf32>
    %178 = arith.divf %176, %177 : vector<16x128xf32>
    %c0_72 = arith.constant 0 : index
    %c0_73 = arith.constant 0 : index
    %c2_74 = arith.constant 2 : index
    %c0_75 = arith.constant 0 : index
    %c0_76 = arith.constant 0 : index
    %179 = vector.load %arg6[%c0_72, %c0_73, %c2_74, %c0_75, %c0_76] : memref<1x3x4x16x128xf32, #tpu.memory_space<vmem>>, vector<1x1x1x16x128xf32>
    %180 = vector.shape_cast %179 : vector<1x1x1x16x128xf32> to vector<16x128xf32>
    %181 = vector.shape_cast %178 : vector<16x128xf32> to vector<1x1x1x16x128xf32>
    tpu.vector_store %arg6[%c0_72, %c0_73, %c2_74, %c0_75, %c0_76], %181 {strides = array<i32>} : memref<1x3x4x16x128xf32, #tpu.memory_space<vmem>>, vector<1x1x1x16x128xf32>,
    %c3_77 = arith.constant 3 : index
    %182 = memref.load %arg3[%c3_77] : memref<12xf32, #tpu.memory_space<smem>>
    %183 = vector.broadcast %182 : f32 to vector<16x128xf32>
    %184 = arith.mulf %183, %141 : vector<16x128xf32>
    %185 = vector.broadcast %142 : f32 to vector<16x128xf32>
    %186 = arith.addf %184, %185 : vector<16x128xf32>
    %187 = arith.negf %186 : vector<16x128xf32>
    %188 = math.exp %187 : vector<16x128xf32>
    %cst_78 = arith.constant 1.000000e+00 : f32
    %189 = vector.broadcast %cst_78 : f32 to vector<16x128xf32>
    %190 = arith.addf %189, %188 : vector<16x128xf32>
    %191 = arith.divf %189, %190 : vector<16x128xf32>
    %c0_79 = arith.constant 0 : index
    %c0_80 = arith.constant 0 : index
    %c3_81 = arith.constant 3 : index
    %c0_82 = arith.constant 0 : index
    %c0_83 = arith.constant 0 : index
    %192 = vector.load %arg6[%c0_79, %c0_80, %c3_81, %c0_82, %c0_83] : memref<1x3x4x16x128xf32, #tpu.memory_space<vmem>>, vector<1x1x1x16x128xf32>
    %193 = vector.shape_cast %192 : vector<1x1x1x16x128xf32> to vector<16x128xf32>
    %194 = vector.shape_cast %191 : vector<16x128xf32> to vector<1x1x1x16x128xf32>
    tpu.vector_store %arg6[%c0_79, %c0_80, %c3_81, %c0_82, %c0_83], %194 {strides = array<i32>} : memref<1x3x4x16x128xf32, #tpu.memory_space<vmem>>, vector<1x1x1x16x128xf32>,
    %c1_84 = arith.constant 1 : index
    %195 = memref.load %arg4[%c1_84] : memref<3xf32, #tpu.memory_space<smem>>
    %c4_85 = arith.constant 4 : index
    %196 = memref.load %arg3[%c4_85] : memref<12xf32, #tpu.memory_space<smem>>
    %197 = vector.broadcast %196 : f32 to vector<16x128xf32>
    %198 = arith.mulf %197, %141 : vector<16x128xf32>
    %199 = vector.broadcast %195 : f32 to vector<16x128xf32>
    %200 = arith.addf %198, %199 : vector<16x128xf32>
    %201 = arith.negf %200 : vector<16x128xf32>
    %202 = math.exp %201 : vector<16x128xf32>
    %cst_86 = arith.constant 1.000000e+00 : f32
    %203 = vector.broadcast %cst_86 : f32 to vector<16x128xf32>
    %204 = arith.addf %203, %202 : vector<16x128xf32>
    %205 = arith.divf %203, %204 : vector<16x128xf32>
    %c0_87 = arith.constant 0 : index
    %c1_88 = arith.constant 1 : index
    %c0_89 = arith.constant 0 : index
    %c0_90 = arith.constant 0 : index
    %c0_91 = arith.constant 0 : index
    %206 = vector.load %arg6[%c0_87, %c1_88, %c0_89, %c0_90, %c0_91] : memref<1x3x4x16x128xf32, #tpu.memory_space<vmem>>, vector<1x1x1x16x128xf32>
    %207 = vector.shape_cast %206 : vector<1x1x1x16x128xf32> to vector<16x128xf32>
    %208 = vector.shape_cast %205 : vector<16x128xf32> to vector<1x1x1x16x128xf32>
    tpu.vector_store %arg6[%c0_87, %c1_88, %c0_89, %c0_90, %c0_91], %208 {strides = array<i32>} : memref<1x3x4x16x128xf32, #tpu.memory_space<vmem>>, vector<1x1x1x16x128xf32>,
    %c5_92 = arith.constant 5 : index
    %209 = memref.load %arg3[%c5_92] : memref<12xf32, #tpu.memory_space<smem>>
    %210 = vector.broadcast %209 : f32 to vector<16x128xf32>
    %211 = arith.mulf %210, %141 : vector<16x128xf32>
    %212 = vector.broadcast %195 : f32 to vector<16x128xf32>
    %213 = arith.addf %211, %212 : vector<16x128xf32>
    %214 = arith.negf %213 : vector<16x128xf32>
    %215 = math.exp %214 : vector<16x128xf32>
    %cst_93 = arith.constant 1.000000e+00 : f32
    %216 = vector.broadcast %cst_93 : f32 to vector<16x128xf32>
    %217 = arith.addf %216, %215 : vector<16x128xf32>
    %218 = arith.divf %216, %217 : vector<16x128xf32>
    %c0_94 = arith.constant 0 : index
    %c1_95 = arith.constant 1 : index
    %c1_96 = arith.constant 1 : index
    %c0_97 = arith.constant 0 : index
    %c0_98 = arith.constant 0 : index
    %219 = vector.load %arg6[%c0_94, %c1_95, %c1_96, %c0_97, %c0_98] : memref<1x3x4x16x128xf32, #tpu.memory_space<vmem>>, vector<1x1x1x16x128xf32>
    %220 = vector.shape_cast %219 : vector<1x1x1x16x128xf32> to vector<16x128xf32>
    %221 = vector.shape_cast %218 : vector<16x128xf32> to vector<1x1x1x16x128xf32>
    tpu.vector_store %arg6[%c0_94, %c1_95, %c1_96, %c0_97, %c0_98], %221 {strides = array<i32>} : memref<1x3x4x16x128xf32, #tpu.memory_space<vmem>>, vector<1x1x1x16x128xf32>,
    %c6_99 = arith.constant 6 : index
    %222 = memref.load %arg3[%c6_99] : memref<12xf32, #tpu.memory_space<smem>>
    %223 = vector.broadcast %222 : f32 to vector<16x128xf32>
    %224 = arith.mulf %223, %141 : vector<16x128xf32>
    %225 = vector.broadcast %195 : f32 to vector<16x128xf32>
    %226 = arith.addf %224, %225 : vector<16x128xf32>
    %227 = arith.negf %226 : vector<16x128xf32>
    %228 = math.exp %227 : vector<16x128xf32>
    %cst_100 = arith.constant 1.000000e+00 : f32
    %229 = vector.broadcast %cst_100 : f32 to vector<16x128xf32>
    %230 = arith.addf %229, %228 : vector<16x128xf32>
    %231 = arith.divf %229, %230 : vector<16x128xf32>
    %c0_101 = arith.constant 0 : index
    %c1_102 = arith.constant 1 : index
    %c2_103 = arith.constant 2 : index
    %c0_104 = arith.constant 0 : index
    %c0_105 = arith.constant 0 : index
    %232 = vector.load %arg6[%c0_101, %c1_102, %c2_103, %c0_104, %c0_105] : memref<1x3x4x16x128xf32, #tpu.memory_space<vmem>>, vector<1x1x1x16x128xf32>
    %233 = vector.shape_cast %232 : vector<1x1x1x16x128xf32> to vector<16x128xf32>
    %234 = vector.shape_cast %231 : vector<16x128xf32> to vector<1x1x1x16x128xf32>
    tpu.vector_store %arg6[%c0_101, %c1_102, %c2_103, %c0_104, %c0_105], %234 {strides = array<i32>} : memref<1x3x4x16x128xf32, #tpu.memory_space<vmem>>, vector<1x1x1x16x128xf32>,
    %c7_106 = arith.constant 7 : index
    %235 = memref.load %arg3[%c7_106] : memref<12xf32, #tpu.memory_space<smem>>
    %236 = vector.broadcast %235 : f32 to vector<16x128xf32>
    %237 = arith.mulf %236, %141 : vector<16x128xf32>
    %238 = vector.broadcast %195 : f32 to vector<16x128xf32>
    %239 = arith.addf %237, %238 : vector<16x128xf32>
    %240 = arith.negf %239 : vector<16x128xf32>
    %241 = math.exp %240 : vector<16x128xf32>
    %cst_107 = arith.constant 1.000000e+00 : f32
    %242 = vector.broadcast %cst_107 : f32 to vector<16x128xf32>
    %243 = arith.addf %242, %241 : vector<16x128xf32>
    %244 = arith.divf %242, %243 : vector<16x128xf32>
    %c0_108 = arith.constant 0 : index
    %c1_109 = arith.constant 1 : index
    %c3_110 = arith.constant 3 : index
    %c0_111 = arith.constant 0 : index
    %c0_112 = arith.constant 0 : index
    %245 = vector.load %arg6[%c0_108, %c1_109, %c3_110, %c0_111, %c0_112] : memref<1x3x4x16x128xf32, #tpu.memory_space<vmem>>, vector<1x1x1x16x128xf32>
    %246 = vector.shape_cast %245 : vector<1x1x1x16x128xf32> to vector<16x128xf32>
    %247 = vector.shape_cast %244 : vector<16x128xf32> to vector<1x1x1x16x128xf32>
    tpu.vector_store %arg6[%c0_108, %c1_109, %c3_110, %c0_111, %c0_112], %247 {strides = array<i32>} : memref<1x3x4x16x128xf32, #tpu.memory_space<vmem>>, vector<1x1x1x16x128xf32>,
    %c2_113 = arith.constant 2 : index
    %248 = memref.load %arg4[%c2_113] : memref<3xf32, #tpu.memory_space<smem>>
    %c8_114 = arith.constant 8 : index
    %249 = memref.load %arg3[%c8_114] : memref<12xf32, #tpu.memory_space<smem>>
    %250 = vector.broadcast %249 : f32 to vector<16x128xf32>
    %251 = arith.mulf %250, %141 : vector<16x128xf32>
    %252 = vector.broadcast %248 : f32 to vector<16x128xf32>
    %253 = arith.addf %251, %252 : vector<16x128xf32>
    %254 = arith.negf %253 : vector<16x128xf32>
    %255 = math.exp %254 : vector<16x128xf32>
    %cst_115 = arith.constant 1.000000e+00 : f32
    %256 = vector.broadcast %cst_115 : f32 to vector<16x128xf32>
    %257 = arith.addf %256, %255 : vector<16x128xf32>
    %258 = arith.divf %256, %257 : vector<16x128xf32>
    %c0_116 = arith.constant 0 : index
    %c2_117 = arith.constant 2 : index
    %c0_118 = arith.constant 0 : index
    %c0_119 = arith.constant 0 : index
    %c0_120 = arith.constant 0 : index
    %259 = vector.load %arg6[%c0_116, %c2_117, %c0_118, %c0_119, %c0_120] : memref<1x3x4x16x128xf32, #tpu.memory_space<vmem>>, vector<1x1x1x16x128xf32>
    %260 = vector.shape_cast %259 : vector<1x1x1x16x128xf32> to vector<16x128xf32>
    %261 = vector.shape_cast %258 : vector<16x128xf32> to vector<1x1x1x16x128xf32>
    tpu.vector_store %arg6[%c0_116, %c2_117, %c0_118, %c0_119, %c0_120], %261 {strides = array<i32>} : memref<1x3x4x16x128xf32, #tpu.memory_space<vmem>>, vector<1x1x1x16x128xf32>,
    %c9_121 = arith.constant 9 : index
    %262 = memref.load %arg3[%c9_121] : memref<12xf32, #tpu.memory_space<smem>>
    %263 = vector.broadcast %262 : f32 to vector<16x128xf32>
    %264 = arith.mulf %263, %141 : vector<16x128xf32>
    %265 = vector.broadcast %248 : f32 to vector<16x128xf32>
    %266 = arith.addf %264, %265 : vector<16x128xf32>
    %267 = arith.negf %266 : vector<16x128xf32>
    %268 = math.exp %267 : vector<16x128xf32>
    %cst_122 = arith.constant 1.000000e+00 : f32
    %269 = vector.broadcast %cst_122 : f32 to vector<16x128xf32>
    %270 = arith.addf %269, %268 : vector<16x128xf32>
    %271 = arith.divf %269, %270 : vector<16x128xf32>
    %c0_123 = arith.constant 0 : index
    %c2_124 = arith.constant 2 : index
    %c1_125 = arith.constant 1 : index
    %c0_126 = arith.constant 0 : index
    %c0_127 = arith.constant 0 : index
    %272 = vector.load %arg6[%c0_123, %c2_124, %c1_125, %c0_126, %c0_127] : memref<1x3x4x16x128xf32, #tpu.memory_space<vmem>>, vector<1x1x1x16x128xf32>
    %273 = vector.shape_cast %272 : vector<1x1x1x16x128xf32> to vector<16x128xf32>
    %274 = vector.shape_cast %271 : vector<16x128xf32> to vector<1x1x1x16x128xf32>
    tpu.vector_store %arg6[%c0_123, %c2_124, %c1_125, %c0_126, %c0_127], %274 {strides = array<i32>} : memref<1x3x4x16x128xf32, #tpu.memory_space<vmem>>, vector<1x1x1x16x128xf32>,
    %c10_128 = arith.constant 10 : index
    %275 = memref.load %arg3[%c10_128] : memref<12xf32, #tpu.memory_space<smem>>
    %276 = vector.broadcast %275 : f32 to vector<16x128xf32>
    %277 = arith.mulf %276, %141 : vector<16x128xf32>
    %278 = vector.broadcast %248 : f32 to vector<16x128xf32>
    %279 = arith.addf %277, %278 : vector<16x128xf32>
    %280 = arith.negf %279 : vector<16x128xf32>
    %281 = math.exp %280 : vector<16x128xf32>
    %cst_129 = arith.constant 1.000000e+00 : f32
    %282 = vector.broadcast %cst_129 : f32 to vector<16x128xf32>
    %283 = arith.addf %282, %281 : vector<16x128xf32>
    %284 = arith.divf %282, %283 : vector<16x128xf32>
    %c0_130 = arith.constant 0 : index
    %c2_131 = arith.constant 2 : index
    %c2_132 = arith.constant 2 : index
    %c0_133 = arith.constant 0 : index
    %c0_134 = arith.constant 0 : index
    %285 = vector.load %arg6[%c0_130, %c2_131, %c2_132, %c0_133, %c0_134] : memref<1x3x4x16x128xf32, #tpu.memory_space<vmem>>, vector<1x1x1x16x128xf32>
    %286 = vector.shape_cast %285 : vector<1x1x1x16x128xf32> to vector<16x128xf32>
    %287 = vector.shape_cast %284 : vector<16x128xf32> to vector<1x1x1x16x128xf32>
    tpu.vector_store %arg6[%c0_130, %c2_131, %c2_132, %c0_133, %c0_134], %287 {strides = array<i32>} : memref<1x3x4x16x128xf32, #tpu.memory_space<vmem>>, vector<1x1x1x16x128xf32>,
    %c11_135 = arith.constant 11 : index
    %288 = memref.load %arg3[%c11_135] : memref<12xf32, #tpu.memory_space<smem>>
    %289 = vector.broadcast %288 : f32 to vector<16x128xf32>
    %290 = arith.mulf %289, %141 : vector<16x128xf32>
    %291 = vector.broadcast %248 : f32 to vector<16x128xf32>
    %292 = arith.addf %290, %291 : vector<16x128xf32>
    %293 = arith.negf %292 : vector<16x128xf32>
    %294 = math.exp %293 : vector<16x128xf32>
    %cst_136 = arith.constant 1.000000e+00 : f32
    %295 = vector.broadcast %cst_136 : f32 to vector<16x128xf32>
    %296 = arith.addf %295, %294 : vector<16x128xf32>
    %297 = arith.divf %295, %296 : vector<16x128xf32>
    %c0_137 = arith.constant 0 : index
    %c2_138 = arith.constant 2 : index
    %c3_139 = arith.constant 3 : index
    %c0_140 = arith.constant 0 : index
    %c0_141 = arith.constant 0 : index
    %298 = vector.load %arg6[%c0_137, %c2_138, %c3_139, %c0_140, %c0_141] : memref<1x3x4x16x128xf32, #tpu.memory_space<vmem>>, vector<1x1x1x16x128xf32>
    %299 = vector.shape_cast %298 : vector<1x1x1x16x128xf32> to vector<16x128xf32>
    %300 = vector.shape_cast %297 : vector<16x128xf32> to vector<1x1x1x16x128xf32>
    tpu.vector_store %arg6[%c0_137, %c2_138, %c3_139, %c0_140, %c0_141], %300 {strides = array<i32>} : memref<1x3x4x16x128xf32, #tpu.memory_space<vmem>>, vector<1x1x1x16x128xf32>,
    return
  }
  func.func @transform_0(%arg0: i32) -> i32 {
    %c0_i32 = arith.constant 0 : i32
    %c0_i32_0 = arith.constant 0 : i32
    return %c0_i32 : i32
  }
  func.func @transform_1(%arg0: i32) -> i32 {
    %c0_i32 = arith.constant 0 : i32
    %c0_i32_0 = arith.constant 0 : i32
    return %c0_i32 : i32
  }
  func.func @transform_2(%arg0: i32) -> i32 {
    %c0_i32 = arith.constant 0 : i32
    %c0_i32_0 = arith.constant 0 : i32
    return %c0_i32 : i32
  }
  func.func @transform_3(%arg0: i32) -> i32 {
    %c0_i32 = arith.constant 0 : i32
    %c0_i32_0 = arith.constant 0 : i32
    return %c0_i32 : i32
  }
  func.func @transform_4(%arg0: i32) -> (i32, i32, i32, i32) {
    %c0_i32 = arith.constant 0 : i32
    %c0_i32_0 = arith.constant 0 : i32
    %c0_i32_1 = arith.constant 0 : i32
    %c0_i32_2 = arith.constant 0 : i32
    return %arg0, %c0_i32, %c0_i32_0, %c0_i32_1 : i32, i32, i32, i32
  }
  func.func @transform_5(%arg0: i32) -> (i32, i32, i32, i32, i32) {
    %c0_i32 = arith.constant 0 : i32
    %c0_i32_0 = arith.constant 0 : i32
    %c0_i32_1 = arith.constant 0 : i32
    %c0_i32_2 = arith.constant 0 : i32
    %c0_i32_3 = arith.constant 0 : i32
    return %arg0, %c0_i32, %c0_i32_0, %c0_i32_1, %c0_i32_2 : i32, i32, i32, i32, i32
  }
}

</mosaic_0001>

<llo_original>
// kernel: fused_deconv_sigmoid_pallas.1
$region0: #{fused_deconv_sigmoid_pallas.1}
  #allocation0 [shape = 'u32[]', space=smem, size = 0x4, offset = 0x4, fixed_abs, tag = 'smem constant byte address 0x4 - core index']
  #allocation1 [shape = 'u32[144,128]{1,0:T(1,128)}', space=vmem, size = 0x12000, scoped, tag = 'internal scratch']
  #allocation2 [shape = 'f32[16,128]{1,0:T(8,128)}', space=vmem, size = 0x2000, scoped, tag = 'scratch operand']
  #allocation3 [shape = 'f32[1]{0:T(128)S(6)}', space=smem, size = 0x200, scoped, tag = 'scoped memory for fused_deconv_sigmoid_pallas.1']
  %s0 = inlined_call_operand.vmem [shape: f32[27], index: 0, kind: input, shape index: {}]
  %s1 = inlined_call_operand.<no memory space> [shape: f32[1], index: 1, kind: input, shape index: {}]
  %s2 = inlined_call_operand.vmem [shape: f32[12], index: 2, kind: input, shape index: {}]
  %s3 = inlined_call_operand.hbm [shape: f32[3], index: 3, kind: input, shape index: {}]
  %s4 = inlined_call_operand.vmem [shape: f32[1,3,17,33], index: 4, kind: input, shape index: {}]
  %s5 = inlined_call_operand.vmem [shape: f32[1,3,4,16,128], index: 5, kind: output, shape index: {}]
  %s6 = sld [smem:[#allocation0]]
  $region42: #{fused_deconv_sigmoid_pallas.1} parent=0
    _
  %s8 = ssub.s32 1, %s6
  %s9 = scalar_select 0, %s8, %s6
  %10 = sst [smem:[#allocation3]] %s1
  $region1: #{fused_deconv_sigmoid_pallas.1} parent=0
    #allocation4 [shape = 'u8[512]{0}', space=smem, size = 0x200, scoped, tag = 'input window, operand 0, single buffered']
    #allocation5 [shape = 's32[1]{0}', space=sflag, size = 0x4, scoped, tag = 'scoped memory for fused_deconv_sigmoid_pallas.1']
    #allocation6 [shape = 's32[1]{0}', space=sflag, size = 0x4, scoped, tag = 'scoped memory for fused_deconv_sigmoid_pallas.1']
    #allocation7 [shape = 'u8[512]{0}', space=smem, size = 0x200, scoped, tag = 'input window, operand 2, single buffered']
    #allocation8 [shape = 's32[1]{0}', space=sflag, size = 0x4, scoped, tag = 'scoped memory for fused_deconv_sigmoid_pallas.1']
    #allocation9 [shape = 'u8[512]{0}', space=smem, size = 0x200, scoped, tag = 'input window, operand 3, single buffered']
    %11 = vsyncpa [#allocation6], 0
    %12 = vsyncpa [#allocation8], 0
    %13 = vsyncpa [#allocation5], 0
    // Predicated region
    $region2: #{fused_deconv_sigmoid_pallas.1} parent=1 // pred_check
      _
    $region3: #{fused_deconv_sigmoid_pallas.1} parent=1 // pred_check_branch
      %15 = sbr.rel (0) target = $region5
    $region4: #{fused_deconv_sigmoid_pallas.1} parent=1 // pred_region
      %s17 = ssub.s32 16, 16
      %18 = vsyncadd [#allocation6], %s17
      %s20 = sshll.u32 %s0, 4
      %s21 = int_to_ptr.vmem [resolvable:$true] %s20
      %23 = dma.vmem_to_smem %s21, 16, [#allocation4], [#allocation6]
    $region5: #{fused_deconv_sigmoid_pallas.1} parent=1 // pred_fallthru
      _
    // Predicated region
    $region6: #{fused_deconv_sigmoid_pallas.1} parent=1 // pred_check
      _
    $region7: #{fused_deconv_sigmoid_pallas.1} parent=1 // pred_check_branch
      %25 = sbr.rel (0) target = $region9
    $region8: #{fused_deconv_sigmoid_pallas.1} parent=1 // pred_region
      _
    $region9: #{fused_deconv_sigmoid_pallas.1} parent=1 // pred_fallthru
      _
    // Predicated region
    $region10: #{fused_deconv_sigmoid_pallas.1} parent=1 // pred_check
      _
    $region11: #{fused_deconv_sigmoid_pallas.1} parent=1 // pred_check_branch
      %27 = sbr.rel (0) target = $region13
    $region12: #{fused_deconv_sigmoid_pallas.1} parent=1 // pred_region
      %s29 = ssub.s32 16, 16
      %30 = vsyncadd [#allocation8], %s29
      %s32 = sshll.u32 %s2, 4
      %s33 = int_to_ptr.vmem [resolvable:$true] %s32
      %35 = dma.vmem_to_smem %s33, 16, [#allocation7], [#allocation8]
    $region13: #{fused_deconv_sigmoid_pallas.1} parent=1 // pred_fallthru
      _
    // Predicated region
    $region14: #{fused_deconv_sigmoid_pallas.1} parent=1 // pred_check
      _
    $region15: #{fused_deconv_sigmoid_pallas.1} parent=1 // pred_check_branch
      %37 = sbr.rel (0) target = $region17
    $region16: #{fused_deconv_sigmoid_pallas.1} parent=1 // pred_region
      %s39 = ssub.s32 16, 16
      %40 = vsyncadd [#allocation5], %s39
      %43 = dma.hbm_to_smem %s3, 16, [#allocation9], [#allocation5]
    $region17: #{fused_deconv_sigmoid_pallas.1} parent=1 // pred_fallthru
      _
    // Predicated region
    $region18: #{fused_deconv_sigmoid_pallas.1} parent=1 // pred_check
      _
    $region19: #{fused_deconv_sigmoid_pallas.1} parent=1 // pred_check_branch
      %45 = sbr.rel (0) target = $region21
    $region20: #{fused_deconv_sigmoid_pallas.1} parent=1 // pred_region
      _
    $region21: #{fused_deconv_sigmoid_pallas.1} parent=1 // pred_fallthru
      _
    // Predicated region
    $region22: #{fused_deconv_sigmoid_pallas.1} parent=1 // pred_check
      _
    $region23: #{fused_deconv_sigmoid_pallas.1} parent=1 // pred_check_branch
      %47 = sbr.rel (0) target = $region25
    $region24: #{fused_deconv_sigmoid_pallas.1} parent=1 // pred_region
      %48 = dma.done [#allocation6], 16
    $region25: #{fused_deconv_sigmoid_pallas.1} parent=1 // pred_fallthru
      _
    // Predicated region
    $region26: #{fused_deconv_sigmoid_pallas.1} parent=1 // pred_check
      _
    $region27: #{fused_deconv_sigmoid_pallas.1} parent=1 // pred_check_branch
      %50 = sbr.rel (0) target = $region29
    $region28: #{fused_deconv_sigmoid_pallas.1} parent=1 // pred_region
      %51 = dma.done [#allocation8], 16
    $region29: #{fused_deconv_sigmoid_pallas.1} parent=1 // pred_fallthru
      _
    // Predicated region
    $region30: #{fused_deconv_sigmoid_pallas.1} parent=1 // pred_check
      _
    $region31: #{fused_deconv_sigmoid_pallas.1} parent=1 // pred_check_branch
      %53 = sbr.rel (0) target = $region33
    $region32: #{fused_deconv_sigmoid_pallas.1} parent=1 // pred_region
      %54 = dma.done [#allocation5], 16
    $region33: #{fused_deconv_sigmoid_pallas.1} parent=1 // pred_fallthru
      _
    %55 = sfence
    %s56 = sld [smem:[#allocation3]]
    %v57 = vld [vmem:[%s4] sm:$0xff]
    %v58 = vld [vmem:[%s4 + $0x8] sm:$0xff]
    %v59 = vld [vmem:[%s4 + $0x1] sm:$0xff]
    %v60 = vld [vmem:[%s4 + $0x9] sm:$0xff]
    %s61 = sld [smem:[#allocation4 + $0x4]]
    %v62 = vstv %s61
    %v63 = vmul.f32 %v62, %v57
    %v64 = vmul.f32 %v62, %v58
    %s65 = sld [smem:[#allocation4 + $0x3]]
    %v66 = vstv %s65
    %v67 = vmul.f32 %v66, %v57
    %v68 = vmul.f32 %v66, %v58
    %s69 = sld [smem:[#allocation4 + $0x5]]
    %v70 = vstv %s69
    %v71 = vmul.f32 %v70, %v57
    %v72 = vmul.f32 %v70, %v58
    %75 = vrot.lane.b32.xlu0 %v71, 1
    %v76 = vpop.permute.xlu0 %75
    %77 = vrot.lane.b32.xlu0 %v72, 1
    %v78 = vpop.permute.xlu0 %77
    %v81 = vadd.f32 %v67, %v76
    %v82 = vadd.f32 %v68, %v78
    %s83 = sld [smem:[#allocation4 + $0x1]]
    %v84 = vstv %s83
    %v85 = vmul.f32 %v84, %v59
    %v86 = vmul.f32 %v84, %v60
    %s87 = sld [smem:[#allocation4 + $0x7]]
    %v88 = vstv %s87
    %v89 = vmul.f32 %v88, %v57
    %v90 = vmul.f32 %v88, %v58
    %v91 = vadd.f32 %v85, %v89
    %v92 = vadd.f32 %v86, %v90
    %s93 = sld [smem:[#allocation4]]
    %v94 = vstv %s93
    %v95 = vmul.f32 %v94, %v59
    %v96 = vmul.f32 %v94, %v60
    %s97 = sld [smem:[#allocation4 + $0x2]]
    %v98 = vstv %s97
    %v99 = vmul.f32 %v98, %v59
    %v100 = vmul.f32 %v98, %v60
    %103 = vrot.lane.b32.xlu0 %v99, 1
    %v104 = vpop.permute.xlu0 %103
    %105 = vrot.lane.b32.xlu0 %v100, 1
    %v106 = vpop.permute.xlu0 %105
    %v109 = vadd.f32 %v95, %v104
    %v110 = vadd.f32 %v96, %v106
    %s111 = sld [smem:[#allocation4 + $0x6]]
    %v112 = vstv %s111
    %v113 = vmul.f32 %v112, %v57
    %v114 = vmul.f32 %v112, %v58
    %s115 = sld [smem:[#allocation4 + $0x8]]
    %v116 = vstv %s115
    %v117 = vmul.f32 %v116, %v57
    %v118 = vmul.f32 %v116, %v58
    %121 = vrot.lane.b32.xlu0 %v117, 1
    %v122 = vpop.permute.xlu0 %121
    %123 = vrot.lane.b32.xlu0 %v118, 1
    %v124 = vpop.permute.xlu0 %123
    %v127 = vadd.f32 %v113, %v122
    %v128 = vadd.f32 %v114, %v124
    %v129 = vadd.f32 %v109, %v127
    %v130 = vadd.f32 %v110, %v128
    %s131 = scalar_lea.vmem %s4, 24
    %v132 = vld [vmem:[%s131] sm:$0xff]
    %v133 = vld [vmem:[%s131 + $0x8] sm:$0xff]
    %v134 = vld [vmem:[%s131 + $0x1] sm:$0xff]
    %v135 = vld [vmem:[%s131 + $0x9] sm:$0xff]
    %s136 = sld [smem:[#allocation4 + $0xd]]
    %v137 = vstv %s136
    %v138 = vmul.f32 %v137, %v132
    %v139 = vmul.f32 %v137, %v133
    %s140 = sld [smem:[#allocation4 + $0xc]]
    %v141 = vstv %s140
    %v142 = vmul.f32 %v141, %v132
    %v143 = vmul.f32 %v141, %v133
    %s144 = sld [smem:[#allocation4 + $0xe]]
    %v145 = vstv %s144
    %v146 = vmul.f32 %v145, %v132
    %v147 = vmul.f32 %v145, %v133
    %150 = vrot.lane.b32.xlu0 %v146, 1
    %v151 = vpop.permute.xlu0 %150
    %152 = vrot.lane.b32.xlu0 %v147, 1
    %v153 = vpop.permute.xlu0 %152
    %v156 = vadd.f32 %v142, %v151
    %v157 = vadd.f32 %v143, %v153
    %s158 = sld [smem:[#allocation4 + $0xa]]
    %v159 = vstv %s158
    %v160 = vmul.f32 %v159, %v134
    %v161 = vmul.f32 %v159, %v135
    %s162 = sld [smem:[#allocation4 + $0x10]]
    %v163 = vstv %s162
    %v164 = vmul.f32 %v163, %v132
    %v165 = vmul.f32 %v163, %v133
    %v166 = vadd.f32 %v160, %v164
    %v167 = vadd.f32 %v161, %v165
    %s168 = sld [smem:[#allocation4 + $0x9]]
    %v169 = vstv %s168
    %v170 = vmul.f32 %v169, %v134
    %v171 = vmul.f32 %v169, %v135
    %s172 = sld [smem:[#allocation4 + $0xb]]
    %v173 = vstv %s172
    %v174 = vmul.f32 %v173, %v134
    %v175 = vmul.f32 %v173, %v135
    %178 = vrot.lane.b32.xlu0 %v174, 1
    %v179 = vpop.permute.xlu0 %178
    %180 = vrot.lane.b32.xlu0 %v175, 1
    %v181 = vpop.permute.xlu0 %180
    %v184 = vadd.f32 %v170, %v179
    %v185 = vadd.f32 %v171, %v181
    %s186 = sld [smem:[#allocation4 + $0xf]]
    %v187 = vstv %s186
    %v188 = vmul.f32 %v187, %v132
    %v189 = vmul.f32 %v187, %v133
    %s190 = sld [smem:[#allocation4 + $0x11]]
    %v191 = vstv %s190
    %v192 = vmul.f32 %v191, %v132
    %v193 = vmul.f32 %v191, %v133
    %196 = vrot.lane.b32.xlu0 %v192, 1
    %v197 = vpop.permute.xlu0 %196
    %198 = vrot.lane.b32.xlu0 %v193, 1
    %v199 = vpop.permute.xlu0 %198
    %v202 = vadd.f32 %v188, %v197
    %v203 = vadd.f32 %v189, %v199
    %v204 = vadd.f32 %v184, %v202
    %v205 = vadd.f32 %v185, %v203
    %v206 = vadd.f32 %v63, %v138
    %v207 = vadd.f32 %v64, %v139
    %v208 = vadd.f32 %v81, %v156
    %v209 = vadd.f32 %v82, %v157
    %v210 = vadd.f32 %v91, %v166
    %v211 = vadd.f32 %v92, %v167
    %v212 = vadd.f32 %v129, %v204
    %v213 = vadd.f32 %v130, %v205
    %s214 = scalar_lea.vmem %s4, 48
    %v215 = vld [vmem:[%s214] sm:$0xff]
    %v216 = vld [vmem:[%s214 + $0x8] sm:$0xff]
    %v217 = vld [vmem:[%s214 + $0x1] sm:$0xff]
    %v218 = vld [vmem:[%s214 + $0x9] sm:$0xff]
    %s219 = sld [smem:[#allocation4 + $0x16]]
    %v220 = vstv %s219
    %v221 = vmul.f32 %v220, %v215
    %v222 = vmul.f32 %v220, %v216
    %s223 = sld [smem:[#allocation4 + $0x15]]
    %v224 = vstv %s223
    %v225 = vmul.f32 %v224, %v215
    %v226 = vmul.f32 %v224, %v216
    %s227 = sld [smem:[#allocation4 + $0x17]]
    %v228 = vstv %s227
    %v229 = vmul.f32 %v228, %v215
    %v230 = vmul.f32 %v228, %v216
    %233 = vrot.lane.b32.xlu0 %v229, 1
    %v234 = vpop.permute.xlu0 %233
    %235 = vrot.lane.b32.xlu0 %v230, 1
    %v236 = vpop.permute.xlu0 %235
    %v239 = vadd.f32 %v225, %v234
    %v240 = vadd.f32 %v226, %v236
    %s241 = sld [smem:[#allocation4 + $0x13]]
    %v242 = vstv %s241
    %v243 = vmul.f32 %v242, %v217
    %v244 = vmul.f32 %v242, %v218
    %s245 = sld [smem:[#allocation4 + $0x19]]
    %v246 = vstv %s245
    %v247 = vmul.f32 %v246, %v215
    %v248 = vmul.f32 %v246, %v216
    %v249 = vadd.f32 %v243, %v247
    %v250 = vadd.f32 %v244, %v248
    %s251 = sld [smem:[#allocation4 + $0x12]]
    %v252 = vstv %s251
    %v253 = vmul.f32 %v252, %v217
    %v254 = vmul.f32 %v252, %v218
    %s255 = sld [smem:[#allocation4 + $0x14]]
    %v256 = vstv %s255
    %v257 = vmul.f32 %v256, %v217
    %v258 = vmul.f32 %v256, %v218
    %261 = vrot.lane.b32.xlu0 %v257, 1
    %v262 = vpop.permute.xlu0 %261
    %263 = vrot.lane.b32.xlu0 %v258, 1
    %v264 = vpop.permute.xlu0 %263
    %v267 = vadd.f32 %v253, %v262
    %v268 = vadd.f32 %v254, %v264
    %s269 = sld [smem:[#allocation4 + $0x18]]
    %v270 = vstv %s269
    %v271 = vmul.f32 %v270, %v215
    %v272 = vmul.f32 %v270, %v216
    %s273 = sld [smem:[#allocation4 + $0x1a]]
    %v274 = vstv %s273
    %v275 = vmul.f32 %v274, %v215
    %v276 = vmul.f32 %v274, %v216
    %279 = vrot.lane.b32.xlu0 %v275, 1
    %v280 = vpop.permute.xlu0 %279
    %281 = vrot.lane.b32.xlu0 %v276, 1
    %v282 = vpop.permute.xlu0 %281
    %v285 = vadd.f32 %v271, %v280
    %v286 = vadd.f32 %v272, %v282
    %v287 = vadd.f32 %v267, %v285
    %v288 = vadd.f32 %v268, %v286
    %v289 = vadd.f32 %v206, %v221
    %v290 = vadd.f32 %v207, %v222
    %v291 = vadd.f32 %v208, %v239
    %v292 = vadd.f32 %v209, %v240
    %v293 = vadd.f32 %v210, %v249
    %v294 = vadd.f32 %v211, %v250
    %v295 = vadd.f32 %v212, %v287
    %v296 = vadd.f32 %v213, %v288
    %v297 = vstv %s56
    %v298 = vadd.f32 %v289, %v297
    %v299 = vadd.f32 %v290, %v297
    %vm300 = vcmask 261120
    %301 = vst.msk [vmem:[#allocation2] sm:$0xff] %vm300, %v298
    %302 = vst.msk [vmem:[#allocation2 + $0x8] sm:$0xff] %vm300, %v299
    %v303 = vadd.f32 %v291, %v297
    %v304 = vadd.f32 %v292, %v297
    %307 = vrot.lane.b32.xlu0 %v303, 31
    %v308 = vpop.permute.xlu0 %307
    %309 = vrot.lane.b32.xlu0 %v304, 31
    %v310 = vpop.permute.xlu0 %309
    %vm313 = vcmask 523520
    %314 = vst.msk [vmem:[#allocation2] sm:$0xff] %vm313, %v308
    %315 = vst.msk [vmem:[#allocation2 + $0x8] sm:$0xff] %vm313, %v310
    %v316 = vadd.f32 %v293, %v297
    %v317 = vadd.f32 %v294, %v297
    %320 = vrot.lane.b32.xlu0 %v316, 64
    %v321 = vpop.permute.xlu0 %320
    %322 = vrot.lane.b32.xlu0 %v317, 64
    %v323 = vpop.permute.xlu0 %322
    %vm326 = vcmask 785920
    %327 = vst.msk [vmem:[#allocation2] sm:$0xff] %vm326, %v321
    %328 = vst.msk [vmem:[#allocation2 + $0x8] sm:$0xff] %vm326, %v323
    %v329 = vadd.f32 %v295, %v297
    %v330 = vadd.f32 %v296, %v297
    %333 = vrot.lane.b32.xlu0 %v329, 95
    %v334 = vpop.permute.xlu0 %333
    %335 = vrot.lane.b32.xlu0 %v330, 95
    %v336 = vpop.permute.xlu0 %335
    %vm339 = vcmask 1048320
    %340 = vst.msk [vmem:[#allocation2] sm:$0xff] %vm339, %v334
    %341 = vst.msk [vmem:[#allocation2 + $0x8] sm:$0xff] %vm339, %v336
    %v342 = vld [vmem:[#allocation2] sm:$0xff]
    %v343 = vld [vmem:[#allocation2 + $0x8] sm:$0xff]
    %s344 = sld [smem:[#allocation9]]
    %s345 = sld [smem:[#allocation7]]
    %v346 = vstv %s345
    %v347 = vmul.f32 %v346, %v342
    %v348 = vmul.f32 %v346, %v343
    %v349 = vstv %s344
    %v350 = vadd.f32 %v347, %v349
    %v351 = vadd.f32 %v348, %v349
    %v352 = vxor.u32 %v350, 2147483648
    %v353 = vxor.u32 %v351, 2147483648
    %v354 = vmul.f32 %v352, 1.442695
    %v355 = vpow.pop %v354
    %v356 = vmul.f32 %v353, 1.442695
    %v357 = vpow.pop %v356
    %v358 = vadd.f32 %v355, 1.0
    %v359 = vadd.f32 %v357, 1.0
    %v360 = vrcp.pop %v358
    %v361 = vmul.f32 1.0, %v360
    %v362 = vrcp.pop %v359
    %v363 = vmul.f32 1.0, %v362
    %364 = vst [vmem:[%s5] sm:$0xff] %v361
    %365 = vst [vmem:[%s5 + $0x8] sm:$0xff] %v363
    %s366 = sld [smem:[#allocation7 + $0x1]]
    %v367 = vstv %s366
    %v368 = vmul.f32 %v367, %v342
    %v369 = vmul.f32 %v367, %v343
    %v370 = vadd.f32 %v368, %v349
    %v371 = vadd.f32 %v369, %v349
    %v372 = vxor.u32 %v370, 2147483648
    %v373 = vxor.u32 %v371, 2147483648
    %v374 = vmul.f32 %v372, 1.442695
    %v375 = vpow.pop %v374
    %v376 = vmul.f32 %v373, 1.442695
    %v377 = vpow.pop %v376
    %v378 = vadd.f32 %v375, 1.0
    %v379 = vadd.f32 %v377, 1.0
    %v380 = vrcp.pop %v378
    %v381 = vmul.f32 1.0, %v380
    %v382 = vrcp.pop %v379
    %v383 = vmul.f32 1.0, %v382
    %s384 = scalar_lea.vmem %s5, 16
    %385 = vst [vmem:[%s384] sm:$0xff] %v381
    %386 = vst [vmem:[%s384 + $0x8] sm:$0xff] %v383
    %s387 = sld [smem:[#allocation7 + $0x2]]
    %v388 = vstv %s387
    %v389 = vmul.f32 %v388, %v342
    %v390 = vmul.f32 %v388, %v343
    %v391 = vadd.f32 %v389, %v349
    %v392 = vadd.f32 %v390, %v349
    %v393 = vxor.u32 %v391, 2147483648
    %v394 = vxor.u32 %v392, 2147483648
    %v395 = vmul.f32 %v393, 1.442695
    %v396 = vpow.pop %v395
    %v397 = vmul.f32 %v394, 1.442695
    %v398 = vpow.pop %v397
    %v399 = vadd.f32 %v396, 1.0
    %v400 = vadd.f32 %v398, 1.0
    %v401 = vrcp.pop %v399
    %v402 = vmul.f32 1.0, %v401
    %v403 = vrcp.pop %v400
    %v404 = vmul.f32 1.0, %v403
    %s405 = scalar_lea.vmem %s5, 32
    %406 = vst [vmem:[%s405] sm:$0xff] %v402
    %407 = vst [vmem:[%s405 + $0x8] sm:$0xff] %v404
    %s408 = sld [smem:[#allocation7 + $0x3]]
    %v409 = vstv %s408
    %v410 = vmul.f32 %v409, %v342
    %v411 = vmul.f32 %v409, %v343
    %v412 = vadd.f32 %v410, %v349
    %v413 = vadd.f32 %v411, %v349
    %v414 = vxor.u32 %v412, 2147483648
    %v415 = vxor.u32 %v413, 2147483648
    %v416 = vmul.f32 %v414, 1.442695
    %v417 = vpow.pop %v416
    %v418 = vmul.f32 %v415, 1.442695
    %v419 = vpow.pop %v418
    %v420 = vadd.f32 %v417, 1.0
    %v421 = vadd.f32 %v419, 1.0
    %v422 = vrcp.pop %v420
    %v423 = vmul.f32 1.0, %v422
    %v424 = vrcp.pop %v421
    %v425 = vmul.f32 1.0, %v424
    %s426 = scalar_lea.vmem %s5, 48
    %427 = vst [vmem:[%s426] sm:$0xff] %v423
    %428 = vst [vmem:[%s426 + $0x8] sm:$0xff] %v425
    %s429 = sld [smem:[#allocation9 + $0x1]]
    %s430 = sld [smem:[#allocation7 + $0x4]]
    %v431 = vstv %s430
    %v432 = vmul.f32 %v431, %v342
    %v433 = vmul.f32 %v431, %v343
    %v434 = vstv %s429
    %v435 = vadd.f32 %v432, %v434
    %v436 = vadd.f32 %v433, %v434
    %v437 = vxor.u32 %v435, 2147483648
    %v438 = vxor.u32 %v436, 2147483648
    %v439 = vmul.f32 %v437, 1.442695
    %v440 = vpow.pop %v439
    %v441 = vmul.f32 %v438, 1.442695
    %v442 = vpow.pop %v441
    %v443 = vadd.f32 %v440, 1.0
    %v444 = vadd.f32 %v442, 1.0
    %v445 = vrcp.pop %v443
    %v446 = vmul.f32 1.0, %v445
    %v447 = vrcp.pop %v444
    %v448 = vmul.f32 1.0, %v447
    %s449 = scalar_lea.vmem %s5, 64
    %450 = vst [vmem:[%s449] sm:$0xff] %v446
    %451 = vst [vmem:[%s449 + $0x8] sm:$0xff] %v448
    %s452 = sld [smem:[#allocation7 + $0x5]]
    %v453 = vstv %s452
    %v454 = vmul.f32 %v453, %v342
    %v455 = vmul.f32 %v453, %v343
    %v456 = vadd.f32 %v454, %v434
    %v457 = vadd.f32 %v455, %v434
    %v458 = vxor.u32 %v456, 2147483648
    %v459 = vxor.u32 %v457, 2147483648
    %v460 = vmul.f32 %v458, 1.442695
    %v461 = vpow.pop %v460
    %v462 = vmul.f32 %v459, 1.442695
    %v463 = vpow.pop %v462
    %v464 = vadd.f32 %v461, 1.0
    %v465 = vadd.f32 %v463, 1.0
    %v466 = vrcp.pop %v464
    %v467 = vmul.f32 1.0, %v466
    %v468 = vrcp.pop %v465
    %v469 = vmul.f32 1.0, %v468
    %s470 = scalar_lea.vmem %s5, 80
    %471 = vst [vmem:[%s470] sm:$0xff] %v467
    %472 = vst [vmem:[%s470 + $0x8] sm:$0xff] %v469
    %s473 = sld [smem:[#allocation7 + $0x6]]
    %v474 = vstv %s473
    %v475 = vmul.f32 %v474, %v342
    %v476 = vmul.f32 %v474, %v343
    %v477 = vadd.f32 %v475, %v434
    %v478 = vadd.f32 %v476, %v434
    %v479 = vxor.u32 %v477, 2147483648
    %v480 = vxor.u32 %v478, 2147483648
    %v481 = vmul.f32 %v479, 1.442695
    %v482 = vpow.pop %v481
    %v483 = vmul.f32 %v480, 1.442695
    %v484 = vpow.pop %v483
    %v485 = vadd.f32 %v482, 1.0
    %v486 = vadd.f32 %v484, 1.0
    %v487 = vrcp.pop %v485
    %v488 = vmul.f32 1.0, %v487
    %v489 = vrcp.pop %v486
    %v490 = vmul.f32 1.0, %v489
    %s491 = scalar_lea.vmem %s5, 96
    %492 = vst [vmem:[%s491] sm:$0xff] %v488
    %493 = vst [vmem:[%s491 + $0x8] sm:$0xff] %v490
    %s494 = sld [smem:[#allocation7 + $0x7]]
    %v495 = vstv %s494
    %v496 = vmul.f32 %v495, %v342
    %v497 = vmul.f32 %v495, %v343
    %v498 = vadd.f32 %v496, %v434
    %v499 = vadd.f32 %v497, %v434
    %v500 = vxor.u32 %v498, 2147483648
    %v501 = vxor.u32 %v499, 2147483648
    %v502 = vmul.f32 %v500, 1.442695
    %v503 = vpow.pop %v502
    %v504 = vmul.f32 %v501, 1.442695
    %v505 = vpow.pop %v504
    %v506 = vadd.f32 %v503, 1.0
    %v507 = vadd.f32 %v505, 1.0
    %v508 = vrcp.pop %v506
    %v509 = vmul.f32 1.0, %v508
    %v510 = vrcp.pop %v507
    %v511 = vmul.f32 1.0, %v510
    %s512 = scalar_lea.vmem %s5, 112
    %513 = vst [vmem:[%s512] sm:$0xff] %v509
    %514 = vst [vmem:[%s512 + $0x8] sm:$0xff] %v511
    %s515 = sld [smem:[#allocation9 + $0x2]]
    %s516 = sld [smem:[#allocation7 + $0x8]]
    %v517 = vstv %s516
    %v518 = vmul.f32 %v517, %v342
    %v519 = vmul.f32 %v517, %v343
    %v520 = vstv %s515
    %v521 = vadd.f32 %v518, %v520
    %v522 = vadd.f32 %v519, %v520
    %v523 = vxor.u32 %v521, 2147483648
    %v524 = vxor.u32 %v522, 2147483648
    %v525 = vmul.f32 %v523, 1.442695
    %v526 = vpow.pop %v525
    %v527 = vmul.f32 %v524, 1.442695
    %v528 = vpow.pop %v527
    %v529 = vadd.f32 %v526, 1.0
    %v530 = vadd.f32 %v528, 1.0
    %v531 = vrcp.pop %v529
    %v532 = vmul.f32 1.0, %v531
    %v533 = vrcp.pop %v530
    %v534 = vmul.f32 1.0, %v533
    %s535 = scalar_lea.vmem %s5, 128
    %536 = vst [vmem:[%s535] sm:$0xff] %v532
    %537 = vst [vmem:[%s535 + $0x8] sm:$0xff] %v534
    %s538 = sld [smem:[#allocation7 + $0x9]]
    %v539 = vstv %s538
    %v540 = vmul.f32 %v539, %v342
    %v541 = vmul.f32 %v539, %v343
    %v542 = vadd.f32 %v540, %v520
    %v543 = vadd.f32 %v541, %v520
    %v544 = vxor.u32 %v542, 2147483648
    %v545 = vxor.u32 %v543, 2147483648
    %v546 = vmul.f32 %v544, 1.442695
    %v547 = vpow.pop %v546
    %v548 = vmul.f32 %v545, 1.442695
    %v549 = vpow.pop %v548
    %v550 = vadd.f32 %v547, 1.0
    %v551 = vadd.f32 %v549, 1.0
    %v552 = vrcp.pop %v550
    %v553 = vmul.f32 1.0, %v552
    %v554 = vrcp.pop %v551
    %v555 = vmul.f32 1.0, %v554
    %s556 = scalar_lea.vmem %s5, 144
    %557 = vst [vmem:[%s556] sm:$0xff] %v553
    %558 = vst [vmem:[%s556 + $0x8] sm:$0xff] %v555
    %s559 = sld [smem:[#allocation7 + $0xa]]
    %v560 = vstv %s559
    %v561 = vmul.f32 %v560, %v342
    %v562 = vmul.f32 %v560, %v343
    %v563 = vadd.f32 %v561, %v520
    %v564 = vadd.f32 %v562, %v520
    %v565 = vxor.u32 %v563, 2147483648
    %v566 = vxor.u32 %v564, 2147483648
    %v567 = vmul.f32 %v565, 1.442695
    %v568 = vpow.pop %v567
    %v569 = vmul.f32 %v566, 1.442695
    %v570 = vpow.pop %v569
    %v571 = vadd.f32 %v568, 1.0
    %v572 = vadd.f32 %v570, 1.0
    %v573 = vrcp.pop %v571
    %v574 = vmul.f32 1.0, %v573
    %v575 = vrcp.pop %v572
    %v576 = vmul.f32 1.0, %v575
    %s577 = scalar_lea.vmem %s5, 160
    %578 = vst [vmem:[%s577] sm:$0xff] %v574
    %579 = vst [vmem:[%s577 + $0x8] sm:$0xff] %v576
    %s580 = sld [smem:[#allocation7 + $0xb]]
    %v581 = vstv %s580
    %v582 = vmul.f32 %v581, %v342
    %v583 = vmul.f32 %v581, %v343
    %v584 = vadd.f32 %v582, %v520
    %v585 = vadd.f32 %v583, %v520
    %v586 = vxor.u32 %v584, 2147483648
    %v587 = vxor.u32 %v585, 2147483648
    %v588 = vmul.f32 %v586, 1.442695
    %v589 = vpow.pop %v588
    %v590 = vmul.f32 %v587, 1.442695
    %v591 = vpow.pop %v590
    %v592 = vadd.f32 %v589, 1.0
    %v593 = vadd.f32 %v591, 1.0
    %v594 = vrcp.pop %v592
    %v595 = vmul.f32 1.0, %v594
    %v596 = vrcp.pop %v593
    %v597 = vmul.f32 1.0, %v596
    %s598 = scalar_lea.vmem %s5, 176
    %599 = vst [vmem:[%s598] sm:$0xff] %v595
    %600 = vst [vmem:[%s598 + $0x8] sm:$0xff] %v597
    // Predicated region
    $region34: #{fused_deconv_sigmoid_pallas.1} parent=1 // pred_check
      _
    $region35: #{fused_deconv_sigmoid_pallas.1} parent=1 // pred_check_branch
      %602 = sbr.rel (0) target = $region37
    $region36: #{fused_deconv_sigmoid_pallas.1} parent=1 // pred_region
      _
    $region37: #{fused_deconv_sigmoid_pallas.1} parent=1 // pred_fallthru
      _
    // Predicated region
    $region38: #{fused_deconv_sigmoid_pallas.1} parent=1 // pred_check
      _
    $region39: #{fused_deconv_sigmoid_pallas.1} parent=1 // pred_check_branch
      %604 = sbr.rel (0) target = $region41
    $region40: #{fused_deconv_sigmoid_pallas.1} parent=1 // pred_region
      _
    $region41: #{fused_deconv_sigmoid_pallas.1} parent=1 // pred_fallthru
      _
    %605 = vsyncpa [#allocation5], 1
    %606 = vsyncpa [#allocation6], 1
    %607 = vsyncpa [#allocation8], 1

</llo_original>
